<compile_context>
chip_gen: v7x
topology: tpu7x:2x2x1
jax: 0.10.0
libtpu: 0.0.40
codegen_flags: <defaults>
</compile_context>

<pallas_src>
import functools

import jax
import jax.numpy as jnp
from jax.experimental import pallas as pl
from jax.experimental.pallas import tpu as pltpu


def _min_row_tile(dtype):
    """Minimum second-to-last block dim for the packed sublane layout."""
    itemsize = jnp.dtype(dtype).itemsize
    if itemsize >= 4:
        return 8
    if itemsize == 2:
        return 16
    return 32


@functools.lru_cache(maxsize=1)
def _tpu_params():
    """Generation-aware (block_budget, vmem_limit_bytes, min_steps, n_cores)."""
    try:
        vmem_cap = int(pltpu.get_tpu_info().vmem_capacity_bytes)
    except Exception:
        vmem_cap = 64 * 1024 * 1024          # conservative: assume v7x per-TC
    if vmem_cap <= 64 * 1024 * 1024:
        # v7x-class: 64 MiB / TC, 2 TCs / chip.  Smaller blocks + >=8 grid
        # steps so each core keeps 3-4 steps of prefetch/writeback overlap.
        return 12 * 1024 * 1024, 36 * 1024 * 1024, 8, 2
    # v5e / v6e: 128 MiB VMEM, single TensorCore.
    return 24 * 1024 * 1024, 48 * 1024 * 1024, 4, 1


def _choose_row_tile(O, I, dtype, *, block_budget, min_steps, n_cores):
    """Pick the row tile: as large as the double-buffered (in+out) block budget
    allows, enough grid steps for pipelining (and TC sharding on v7x), prefer an
    exact divisor of O but never collapse below cap/2 (ragged tail instead)."""
    itemsize = jnp.dtype(dtype).itemsize
    min_tm = _min_row_tile(dtype)
    if O <= min_tm:
        return O                                     # one full-array block
    cap = block_budget // (4 * I * itemsize)         # in+out, double-buffered
    cap = max(min_tm, min(cap, 1024, O))
    fits_whole = 4 * O * I * itemsize <= block_budget
    if n_cores > 1 or not fits_whole:
        # Keep enough grid steps for prefetch/writeback overlap; on multi-TC
        # chips this also shards the grid axis across the cores.
        cap = min(cap, max(min_tm, O // min_steps))
    cap = max(min_tm, (cap // min_tm) * min_tm)
    if O % cap == 0:
        return cap
    # Prefer an exact divisor (no ragged last block), but never shrink the
    # tile below cap // 2 -- a padded tail is far cheaper than running the
    # whole tensor at the tiny minimum tile.
    lo = max(min_tm, ((cap // 2) // min_tm) * min_tm)
    for tm in range(cap - min_tm, lo - 1, -min_tm):
        if O % tm == 0:
            return tm
    return cap    # ragged last block: pl.cdiv grid, OOB rows masked on write


def _wn_init_g_kernel(v_ref, g_ref):
    """g := ||v||_row (what nn.utils.weight_norm creates at wrap time)."""
    v = v_ref[...].astype(jnp.float32)
    ss = jnp.sum(v * v, axis=-1, keepdims=True)          # (tm, 1)
    g_ref[...] = jnp.sqrt(ss).astype(g_ref.dtype)


def _wn_kernel(v_ref, g_ref, o_ref):
    """W = v * (g * rsqrt(||v||^2)) with a per-step (tm,1) gain block."""
    vf = v_ref[...].astype(jnp.float32)
    ss = jnp.sum(vf * vf, axis=-1, keepdims=True)         # (tm, 1)
    # One fused per-row scale; rsqrt -> inf on all-zero rows, same as torch.
    scale = g_ref[...].astype(jnp.float32) * jax.lax.rsqrt(ss)
    # Re-read v (cast on the fly) so the f32 upcast above is not live across
    # the reduction -- avoids spilling a multi-MiB f32 copy for bf16 tiles.
    o_ref[...] = (v_ref[...].astype(jnp.float32) * scale).astype(o_ref.dtype)


def _common_params(O, I, v_dtype, block_rows):
    block_budget, vmem_limit, min_steps, n_cores = _tpu_params()
    tm = block_rows if block_rows is not None else _choose_row_tile(
        O, I, v_dtype, block_budget=block_budget, min_steps=min_steps,
        n_cores=n_cores)
    min_tm = _min_row_tile(v_dtype)
    assert tm == O or tm % min_tm == 0, (
        f"row tile {tm} must be the full dim or a multiple of {min_tm} for {v_dtype}")
    grid = (pl.cdiv(O, tm),)
    cparams = pltpu.CompilerParams(
        dimension_semantics=("parallel",),
        vmem_limit_bytes=vmem_limit,
    )
    return tm, grid, cparams


def weight_norm_init_g(v, *, block_rows=None):
    """Wrap-time path: compute g = ||v||_row (shape (O,1)) with a single HBM
    read of v and a tiny write of g.  The reparameterized weight at wrap time
    is exactly v, so no O*I output is produced."""
    O, I = v.shape
    tm, grid, cparams = _common_params(O, I, v.dtype, block_rows)
    itemsize = jnp.dtype(v.dtype).itemsize
    cost = pl.CostEstimate(
        flops=2 * O * I,                     # mul + add per element (row ssq)
        transcendentals=O,                   # one sqrt per row
        bytes_accessed=O * I * itemsize + O * itemsize,
    )
    return pl.pallas_call(
        _wn_init_g_kernel,
        out_shape=jax.ShapeDtypeStruct((O, 1), v.dtype),
        grid_spec=pltpu.PrefetchScalarGridSpec(
            num_scalar_prefetch=0,
            grid=grid,
            in_specs=[pl.BlockSpec((tm, I), lambda i: (i, 0))],
            out_specs=pl.BlockSpec((tm, 1), lambda i: (i, 0)),
        ),
        compiler_params=cparams,
        cost_estimate=cost,
    )(v)


def weight_norm(v, g, *, block_rows=None):
    """Runtime path: W = g * v / ||v||_row with an independent per-row gain g
    (shape (O,1)), streamed as a per-step (tm,1) block."""
    O, I = v.shape
    assert g.shape == (O, 1), f"g must have shape ({O}, 1), got {g.shape}"
    tm, grid, cparams = _common_params(O, I, v.dtype, block_rows)
    itemsize = jnp.dtype(v.dtype).itemsize
    cost = pl.CostEstimate(
        flops=4 * O * I,                     # ssq (2) + scale multiply + cast
        transcendentals=O,                   # one rsqrt per row
        bytes_accessed=2 * O * I * itemsize + O * jnp.dtype(g.dtype).itemsize,
    )
    return pl.pallas_call(
        _wn_kernel,
        out_shape=jax.ShapeDtypeStruct((O, I), v.dtype),
        grid_spec=pltpu.PrefetchScalarGridSpec(
            num_scalar_prefetch=0,
            grid=grid,
            in_specs=[
                pl.BlockSpec((tm, I), lambda i: (i, 0)),
                pl.BlockSpec((tm, 1), lambda i: (i, 0)),   # per-step g sliver
            ],
            out_specs=pl.BlockSpec((tm, I), lambda i: (i, 0)),
        ),
        compiler_params=cparams,
        cost_estimate=cost,
    )(v, g)


def wrapper_forward(x, weight_norm_flag=True):
    """JAX/Pallas equivalent of Wrapper.forward (nn.utils.weight_norm at wrap
    time).  g := ||x||_row is computed by the kernel; the recomputed weight
    W = g*x/||x|| equals x exactly, so x is returned unchanged (no O*I write).
    Returns (W, g)."""
    if not weight_norm_flag:
        return x, None
    return x, weight_norm_init_g(x)


if __name__ == "__main__":
    key = jax.random.PRNGKey(0)
    d_model = 64
    O, I = d_model, 3 * d_model          # mapper-like weight: (64, 192)
    x = jax.random.normal(key, (O, I), dtype=jnp.float32)
    norm = jnp.sqrt(jnp.sum(x.astype(jnp.float32) ** 2, axis=-1, keepdims=True))

    # 1) wrap-time path (Wrapper.forward): W returned unchanged, g = ||x||.
    w, g0 = wrapper_forward(x, weight_norm_flag=True)
    g0 = jax.block_until_ready(g0)
    assert w is x, "wrap-time path must return the weight unchanged"
    assert g0.shape == (O, 1) and g0.dtype == x.dtype
    assert jnp.max(jnp.abs(g0 - norm.astype(x.dtype))) < 1e-4, "g init mismatch"

    # 2) runtime path: independent learned gain g (per-step sliver DMA).
    g = (2.0 * norm).astype(x.dtype)
    out_g = jax.block_until_ready(weight_norm(x, g))
    ref_g = (g.astype(jnp.float32) * x / norm).astype(x.dtype)
    assert jnp.max(jnp.abs(out_g - ref_g)) < 1e-4, "weight_norm(v, g) mismatch"

    # 3) bf16 weights: exercises the dtype-gated (>=16-row) minimum tile.
    xb = x.astype(jnp.bfloat16)
    gb = norm.astype(jnp.bfloat16)
    out_b = jax.block_until_ready(weight_norm(xb, gb))
    xb32 = xb.astype(jnp.float32)
    ref_b = (gb.astype(jnp.float32) * xb32
             / jnp.sqrt(jnp.sum(xb32 ** 2, axis=-1, keepdims=True))
             ).astype(jnp.bfloat16)
    diff_b = jnp.max(jnp.abs(out_b.astype(jnp.float32) - ref_b.astype(jnp.float32)))
    assert diff_b < 5e-2, "bf16 weight_norm kernel mismatch"

    # 4) ragged last block (pl.cdiv grid, masked writeback): O not a multiple
    #    of the row tile.
    xr = jax.random.normal(jax.random.PRNGKey(0), (24, 128), dtype=jnp.float32)
    nr = jnp.sqrt(jnp.sum(xr ** 2, axis=-1, keepdims=True))
    gr = (0.5 * nr).astype(xr.dtype)
    out_r = jax.block_until_ready(weight_norm(xr, gr, block_rows=16))
    ref_r = gr * xr / nr
    assert jnp.max(jnp.abs(out_r - ref_r)) < 1e-4, "ragged-block weight_norm mismatch"

    print("KERNEL_OK")
</pallas_src>

<mosaic_0001>
module attributes {stable_mosaic.version = 11 : i64} {
  func.func @_wn_init_g_kernel(%arg0: i32, %arg1: memref<8x192xf32, #tpu.memory_space<vmem>>, %arg2: memref<8x1xf32, #tpu.memory_space<vmem>>) attributes {dimension_semantics = [#tpu.dimension_semantics<parallel>], iteration_bounds = array<i64: 8>, scalar_prefetch = 0 : i64, scratch_operands = 0 : i64, tpu.core_type = #tpu.core_type<tc>, window_params = [{transform_indices = @transform_0, window_bounds = array<i64: 8, 192>}, {transform_indices = @transform_1, window_bounds = array<i64: 8, 1>}]} {
    %c0 = arith.constant 0 : index
    %c0_0 = arith.constant 0 : index
    %0 = vector.load %arg1[%c0, %c0_0] : memref<8x192xf32, #tpu.memory_space<vmem>>, vector<8x192xf32>
    %1 = arith.mulf %0, %0 : vector<8x192xf32>
    %cst = arith.constant dense<0.000000e+00> : vector<8xf32>
    %2 = vector.multi_reduction <add>, %1, %cst [1] : vector<8x192xf32> to vector<8xf32>
    %3 = vector.shape_cast %2 : vector<8xf32> to vector<8x1xf32>
    %4 = math.sqrt %3 : vector<8x1xf32>
    %c0_1 = arith.constant 0 : index
    %c0_2 = arith.constant 0 : index
    %5 = vector.load %arg2[%c0_1, %c0_2] : memref<8x1xf32, #tpu.memory_space<vmem>>, vector<8x1xf32>
    tpu.vector_store %arg2[%c0_1, %c0_2], %4 {strides = array<i32>} : memref<8x1xf32, #tpu.memory_space<vmem>>, vector<8x1xf32>,
    return
  }
  func.func @transform_0(%arg0: i32) -> (i32, i32) {
    %c0_i32 = arith.constant 0 : i32
    %c0_i32_0 = arith.constant 0 : i32
    return %arg0, %c0_i32 : i32, i32
  }
  func.func @transform_1(%arg0: i32) -> (i32, i32) {
    %c0_i32 = arith.constant 0 : i32
    %c0_i32_0 = arith.constant 0 : i32
    return %arg0, %c0_i32 : i32, i32
  }
}

</mosaic_0001>

<llo_original>
// kernel: tpu_custom_call.1
$region0: #{tpu_custom_call.1}
  #allocation0 [shape = 'u32[]', space=smem, size = 0x4, offset = 0x4, fixed_abs, tag = 'smem constant byte address 0x4 - core index']
  #allocation1 [shape = 'u32[144,128]{1,0:T(1,128)}', space=vmem, size = 0x12000, scoped, tag = 'internal scratch']
  %s0 = inlined_call_operand.hbm [shape: f32[64,192], index: 0, kind: input, shape index: {}]
  %s1 = inlined_call_operand.vmem [shape: f32[64,1], index: 1, kind: output, shape index: {}]
  %s2 = sld [smem:[#allocation0]]
  $region41: #{tpu_custom_call.1} parent=0
    _
  %s4 = ssub.s32 1, %s2
  %s5 = scalar_select 0, %s4, %s2
  $region1: #{tpu_custom_call.1} parent=0
    #allocation2 [shape = 'u8[16384]{0}', space=vmem, size = 0x4000, scoped, tag = 'input window, operand 0']
    #allocation3 [shape = 's32[2]{0}', space=sflag, size = 0x8, scoped, tag = 'scoped memory for tpu_custom_call.1']
    %6 = vsyncpa [#allocation3], 0
    %s7 = scalar_lea.sflag [#allocation3], 1
    %8 = vsyncpa %s7, 0
    loop: start=0, step=1, limit=10
    $region2: #{tpu_custom_call.1} parent=1 // loop_pre_header
      _
    $region3: #{tpu_custom_call.1} parent=1 // loop_header
      %s10 = sphi 0, %s14
      %p11 = scmp.ge.s32.totalorder %s10, 10
      %s20 = sphi 0, %s22
      %s23 = sphi 0, %s20
      %s24 = sphi 0, %s23
      %s40 = sphi 0, %s24
      %s46 = sphi 0, %s48
      %s49 = sphi 0, %s46
      %s50 = sphi 0, %s49
      %s66 = sphi 0, %s50
    $region4: #{tpu_custom_call.1} parent=1 // loop_header_branch
      %13 = sbr.rel (%p11) target = $region8
    $region5: #{tpu_custom_call.1} parent=1 // loop_body
      %s15 = ssub.s32 %s10, 1
      %s16 = ssub.s32 %s10, 2
      %s17 = sadd.s32 %s10, 1
      %s18 = ssub.s32 %s10, %s17
      %p19 = scmp.eq.s32.totalorder %s18, 0
      %s21 = sadd.s32 %s20, 1
      %s22 = scalar_select %p19, %s20, %s21
      %p25 = pneg %p19
      %p26 = scmp.eq.s32.totalorder %s10, 7
      %p27 = por %p25, %p26
      %p28 = scmp.ne.s32.totalorder %s20, %s23
      %p29 = scmp.eq.s32.totalorder %s10, 0
      %p30 = por %p28, %p29
      %p31 = scmp.ne.s32.totalorder %s20, %s23
      %p32 = scmp.eq.s32.totalorder %s15, 7
      %p33 = por %p31, %p32
      %p34 = scmp.ne.s32.totalorder %s23, %s24
      %p35 = scmp.eq.s32.totalorder %s15, 0
      %p36 = por %p34, %p35
      %p37 = scmp.ne.s32.totalorder %s23, %s24
      %p38 = scmp.eq.s32.totalorder %s16, 7
      %p39 = por %p37, %p38
      %p41 = scmp.ne.s32.totalorder %s24, %s40
      %p42 = scmp.eq.s32.totalorder %s16, 0
      %p43 = por %p41, %p42
      %s44 = ssub.s32 %s10, %s17
      %p45 = scmp.eq.s32.totalorder %s44, 0
      %s47 = sadd.s32 %s46, 1
      %s48 = scalar_select %p45, %s46, %s47
      %p51 = pneg %p45
      %p52 = scmp.eq.s32.totalorder %s10, 7
      %p53 = por %p51, %p52
      %p54 = scmp.ne.s32.totalorder %s46, %s49
      %p55 = scmp.eq.s32.totalorder %s10, 0
      %p56 = por %p54, %p55
      %p57 = scmp.ne.s32.totalorder %s46, %s49
      %p58 = scmp.eq.s32.totalorder %s15, 7
      %p59 = por %p57, %p58
      %p60 = scmp.ne.s32.totalorder %s49, %s50
      %p61 = scmp.eq.s32.totalorder %s15, 0
      %p62 = por %p60, %p61
      %p63 = scmp.ne.s32.totalorder %s49, %s50
      %p64 = scmp.eq.s32.totalorder %s16, 7
      %p65 = por %p63, %p64
      %p67 = scmp.ne.s32.totalorder %s50, %s66
      %p68 = scmp.eq.s32.totalorder %s16, 0
      %p69 = por %p67, %p68
      %p70 = scmp.le.s32.totalorder 1, %s10
      %p71 = scmp.lt.s32.totalorder %s10, 9
      %p72 = pnand %p70, %p71
      %p73 = pneg %p72
      // Predicated region
      $region9: #{tpu_custom_call.1} parent=5 // pred_check
        _
      $region10: #{tpu_custom_call.1} parent=5 // pred_check_branch
        %75 = sbr.rel (%p72) target = $region12
      $region11: #{tpu_custom_call.1} parent=5 // pred_region
        %s76 = ssub.s32 %s10, 1
      $region12: #{tpu_custom_call.1} parent=5 // pred_fallthru
        _
      %p77 = scmp.lt.s32.totalorder %s10, 8
      // Predicated region
      $region13: #{tpu_custom_call.1} parent=5 // pred_check
        %p78 = pneg %p77
      $region14: #{tpu_custom_call.1} parent=5 // pred_check_branch
        %80 = sbr.rel (%p78) target = $region16
      $region15: #{tpu_custom_call.1} parent=5 // pred_region
        // Predicated region
        $region17: #{tpu_custom_call.1} parent=15 // pred_check
          %p81 = pneg %p30
        $region18: #{tpu_custom_call.1} parent=15 // pred_check_branch
          %83 = sbr.rel (%p81) target = $region20
        $region19: #{tpu_custom_call.1} parent=15 // pred_region
          %s84 = sand.u32 %s20, 1
          %s85 = scalar_lea.sflag [#allocation3], %s84
          %s86 = sand.u32 %s20, 1
          %s87 = smul.addr %s86, 16
          %s88 = scalar_lea.vmem [#allocation2], %s87
          %s90 = ssub.s32 256, 256
          %91 = vsyncadd %s85, %s90
          %s92 = smul.addr %s10, 2
          %s93 = smul.addr %s92, 128
          %s94 = scalar_lea.hbm %s0, %s93
          %s96 = sshll.u32 %s88, 4
          %s97 = int_to_ptr.vmem [resolvable:$true] %s96
          %99 = dma.hbm_to_vmem [thread:$0]  %s94, 256, %s97, %s85
        $region20: #{tpu_custom_call.1} parent=15 // pred_fallthru
          _
      $region16: #{tpu_custom_call.1} parent=5 // pred_fallthru
        _
      %p100 = scmp.le.s32.totalorder 1, %s10
      %p101 = scmp.lt.s32.totalorder %s10, 9
      %p102 = pnand %p100, %p101
      %p103 = pneg %p102
      // Predicated region
      $region21: #{tpu_custom_call.1} parent=5 // pred_check
        _
      $region22: #{tpu_custom_call.1} parent=5 // pred_check_branch
        %105 = sbr.rel (%p102) target = $region24
      $region23: #{tpu_custom_call.1} parent=5 // pred_region
        %s106 = ssub.s32 %s10, 1
        %s107 = sand.u32 %s23, 1
        %s108 = scalar_lea.sflag [#allocation3], %s107
        %s109 = sand.u32 %s23, 1
        %s110 = smul.addr %s109, 16
        %s111 = scalar_lea.vmem [#allocation2], %s110
        // Predicated region
        $region25: #{tpu_custom_call.1} parent=23 // pred_check
          %p112 = pneg %p36
        $region26: #{tpu_custom_call.1} parent=23 // pred_check_branch
          %114 = sbr.rel (%p112) target = $region28
        $region27: #{tpu_custom_call.1} parent=23 // pred_region
          %115 = dma.done %s108, 256
        $region28: #{tpu_custom_call.1} parent=23 // pred_fallthru
          _
        %s116 = sand.u32 %s23, 1
        %s117 = scalar_lea.sflag [#allocation3], %s116
        %s118 = sand.u32 %s23, 1
        %s119 = smul.addr %s118, 16
        %s120 = scalar_lea.vmem [#allocation2], %s119
        %p121 = pneg %p36
        %p122 = pneg %p33
        %p123 = pneg %p62
        %p124 = pneg %p59
        %p125 = scmp.lt.s32.totalorder %s15, 7
        %s126 = scalar_select %p125, %s15, 7
        %s127 = smul.addr %s126, 8
        %s128 = scalar_lea.vmem %s1, %s127
        %p129 = scmp.lt.s32.totalorder %s15, 7
        %s130 = scalar_select %p129, %s15, 7
        %s131 = smul.addr %s130, 8
        %s132 = scalar_lea.vmem %s1, %s131
        %v133 = vld [vmem:[%s111] sm:$0xff]
        %v134 = vld [vmem:[%s111 + $0x8] sm:$0xff]
        %v135 = vmul.f32 %v133, %v133
        %v136 = vmul.f32 %v134, %v134
        %vm137 = vcmask 523264
        %v138 = vsel %vm137, %v136, 0.0
        %v139 = vadd.f32 %v135, %v138
        %140 = vadd.xlane.f32.xlu0 %v139
        %v141 = vpop.xlane.xlu0 %140
        %v142 = vrsqrt.pop %v141
        %v143 = vmul.f32 %v141, %v142
        %vm144 = vcmp.eq.f32.partialorder %v141, inf
        %v145 = vsel %vm144, %v141, %v143
        %vm146 = vcmp.eq.f32.partialorder %v141, 0.0
        %v147 = vand.u32 %v141, 2147483648
        %v148 = vsel %vm146, %v147, %v145
        %vm149 = vcmask 7168
        %150 = vst.msk [vmem:[%s132] sm:$0xff] %vm149, %v148
        %p151 = scmp.lt.s32.totalorder %s15, 7
        %s152 = scalar_select %p151, %s15, 7
        %s153 = smul.addr %s152, 8
        %s154 = scalar_lea.vmem %s1, %s153
        // Predicated region
        $region29: #{tpu_custom_call.1} parent=23 // pred_check
          %p155 = pneg %p59
        $region30: #{tpu_custom_call.1} parent=23 // pred_check_branch
          %157 = sbr.rel (%p155) target = $region32
        $region31: #{tpu_custom_call.1} parent=23 // pred_region
          _
        $region32: #{tpu_custom_call.1} parent=23 // pred_fallthru
          _
      $region24: #{tpu_custom_call.1} parent=5 // pred_fallthru
        _
      %p158 = scmp.le.s32.totalorder 2, %s10
      // Predicated region
      $region33: #{tpu_custom_call.1} parent=5 // pred_check
        %p159 = pneg %p158
      $region34: #{tpu_custom_call.1} parent=5 // pred_check_branch
        %161 = sbr.rel (%p159) target = $region36
      $region35: #{tpu_custom_call.1} parent=5 // pred_region
        %s162 = ssub.s32 %s10, 2
        // Predicated region
        $region37: #{tpu_custom_call.1} parent=35 // pred_check
          %p163 = pneg %p65
        $region38: #{tpu_custom_call.1} parent=35 // pred_check_branch
          %165 = sbr.rel (%p163) target = $region40
        $region39: #{tpu_custom_call.1} parent=35 // pred_region
          %p166 = scmp.lt.s32.totalorder %s16, 7
          %s167 = scalar_select %p166, %s16, 7
          %s168 = smul.addr %s167, 8
          %s169 = scalar_lea.vmem %s1, %s168
        $region40: #{tpu_custom_call.1} parent=35 // pred_fallthru
          _
      $region36: #{tpu_custom_call.1} parent=5 // pred_fallthru
        _
    $region6: #{tpu_custom_call.1} parent=1 // loop_footer
      %s14 = sadd.s32 1, %s10
    $region7: #{tpu_custom_call.1} parent=1 // loop_footer_branch
      %9 = sbr.rel target = $region3
    $region8: #{tpu_custom_call.1} parent=1 // loop_exit
      _
    %170 = vsyncpa [#allocation3], 1
    %s171 = scalar_lea.sflag [#allocation3], 1
    %172 = vsyncpa %s171, 1

</llo_original>
